<compile_context>
chip_gen: v6e
topology: v6e:2x2x1
jax: 0.10.0
libtpu: 0.0.40
codegen_flags: <defaults>
</compile_context>

<pallas_src>
import jax
import jax.numpy as jnp
from jax.experimental import pallas as pl
from jax.experimental.pallas import tpu as pltpu


def _mtl_loss_kernel(packed_ref, out_ref):
    # packed_ref: (2, T) f32 in VMEM. Row 0 = log_vars, row 1 = per-task losses.
    lv = packed_ref[0:1, :]                      # (1, T) log variances
    ls = packed_ref[1:2, :]                      # (1, T) task losses
    # precision_i * L_i + log_var_i, summed over tasks.
    per_task = jnp.exp(-lv) * ls + lv            # EUP exp + VPU mul/add
    out_ref[0, 0] = jnp.sum(per_task)            # XLU lane reduce -> scalar -> SMEM


def _mtl_forward_pallas(log_vars, losses):
    # Pack into a single (2, T) f32 array so the kernel has exactly one VMEM input.
    packed = jnp.stack(
        [log_vars.astype(jnp.float32), losses.astype(jnp.float32)], axis=0
    )  # (2, T)
    out = pl.pallas_call(
        _mtl_loss_kernel,
        out_shape=jax.ShapeDtypeStruct((1, 1), jnp.float32),
        in_specs=[pl.BlockSpec(memory_space=pltpu.MemorySpace.VMEM)],
        out_specs=pl.BlockSpec(memory_space=pltpu.MemorySpace.SMEM),
    )(packed)
    return out[0, 0]


@jax.custom_vjp
def multi_task_loss(log_vars, L0, L1, L2):
    """Pallas equivalent of MultiTaskLossWrapper.forward(L0, L1, L2).

    log_vars: (task_num,) float32 parameter (task_num == 3 here).
    L0, L1, L2: scalar task losses.
    Returns a scalar float32. Differentiable via custom_vjp.
    """
    losses = jnp.stack(
        [jnp.asarray(L0, jnp.float32),
         jnp.asarray(L1, jnp.float32),
         jnp.asarray(L2, jnp.float32)]
    )
    return _mtl_forward_pallas(log_vars, losses)


def _mtl_fwd(log_vars, L0, L1, L2):
    losses = jnp.stack(
        [jnp.asarray(L0, jnp.float32),
         jnp.asarray(L1, jnp.float32),
         jnp.asarray(L2, jnp.float32)]
    )
    out = _mtl_forward_pallas(log_vars, losses)
    return out, (log_vars.astype(jnp.float32), losses)


def _mtl_bwd(residuals, g):
    log_vars, losses = residuals
    precision = jnp.exp(-log_vars)                       # (T,)
    d_log_vars = g * (1.0 - precision * losses)          # d/dlv_i = 1 - exp(-lv_i)*L_i
    d_losses = g * precision                             # d/dL_i  = exp(-lv_i)
    return d_log_vars, d_losses[0], d_losses[1], d_losses[2]


multi_task_loss.defvjp(_mtl_fwd, _mtl_bwd)


if __name__ == "__main__":
    task_num = 3

    # Deterministic parameter init: nn.Parameter(torch.zeros(task_num))
    log_vars = jnp.zeros((task_num,), dtype=jnp.float32)

    # Deterministic example scalar losses (as produced upstream by 3 task heads).
    key = jax.random.PRNGKey(0)
    k0, k1, k2 = jax.random.split(key, 3)
    L0 = jnp.abs(jax.random.normal(k0, (), dtype=jnp.float32))
    L1 = jnp.abs(jax.random.normal(k1, (), dtype=jnp.float32))
    L2 = jnp.abs(jax.random.normal(k2, (), dtype=jnp.float32))

    result = multi_task_loss(log_vars, L0, L1, L2)
    result = jax.block_until_ready(result)

    # Pure-JAX reference for the exact PyTorch forward semantics.
    def ref_fn(lv, l0, l1, l2):
        return (jnp.exp(-lv[0]) * l0 + lv[0]
                + jnp.exp(-lv[1]) * l1 + lv[1]
                + jnp.exp(-lv[2]) * l2 + lv[2])

    ref = ref_fn(log_vars, L0, L1, L2)
    assert jnp.allclose(result, ref, rtol=1e-6, atol=1e-6), (result, ref)

    # Gradient check (custom_vjp backward is pure JAX; compare against autodiff of ref).
    g_kernel = jax.grad(multi_task_loss, argnums=(0, 1, 2, 3))(log_vars, L0, L1, L2)
    g_ref = jax.grad(ref_fn, argnums=(0, 1, 2, 3))(log_vars, L0, L1, L2)
    for gk, gr in zip(g_kernel, g_ref):
        assert jnp.allclose(gk, gr, rtol=1e-6, atol=1e-6), (gk, gr)

    print("KERNEL_OK")
</pallas_src>

<mosaic_0001>
module attributes {stable_mosaic.version = 11 : i64} {
  func.func @_mtl_loss_kernel(%arg0: memref<2x3xf32, #tpu.memory_space<vmem>>, %arg1: memref<1x1xf32, #tpu.memory_space<smem>>) attributes {dimension_semantics = [], scalar_prefetch = 0 : i64, scratch_operands = 0 : i64, tpu.core_type = #tpu.core_type<tc>} {
    %c0 = arith.constant 0 : index
    %c0_0 = arith.constant 0 : index
    %0 = vector.load %arg0[%c0, %c0_0] : memref<2x3xf32, #tpu.memory_space<vmem>>, vector<1x3xf32>
    %c1 = arith.constant 1 : index
    %c0_1 = arith.constant 0 : index
    %1 = vector.load %arg0[%c1, %c0_1] : memref<2x3xf32, #tpu.memory_space<vmem>>, vector<1x3xf32>
    %cst = arith.constant 0.000000e+00 : f32
    %2 = vector.broadcast %cst : f32 to vector<1x3xf32>
    %3 = arith.subf %2, %0 : vector<1x3xf32>
    %4 = math.exp %3 : vector<1x3xf32>
    %5 = arith.mulf %4, %1 : vector<1x3xf32>
    %6 = arith.addf %5, %0 : vector<1x3xf32>
    %7 = vector.shape_cast %6 : vector<1x3xf32> to vector<1x1x3xf32>
    %cst_2 = arith.constant dense<0.000000e+00> : vector<1xf32>
    %8 = vector.multi_reduction <add>, %7, %cst_2 [1, 2] : vector<1x1x3xf32> to vector<1xf32>
    %9 = vector.shape_cast %8 : vector<1xf32> to vector<1x1x1xf32>
    %10 = vector.extract %9[0, 0, 0] : f32 from vector<1x1x1xf32>
    %c0_3 = arith.constant 0 : index
    %c0_4 = arith.constant 0 : index
    %11 = memref.load %arg1[%c0_3, %c0_4] : memref<1x1xf32, #tpu.memory_space<smem>>
    memref.store %10, %arg1[%c0_3, %c0_4] : memref<1x1xf32, #tpu.memory_space<smem>>
    return
  }
}

</mosaic_0001>

<llo_original>
// kernel: tpu_custom_call.1
$region0: #{tpu_custom_call.1}
  #allocation0 [shape = 'u32[]', space=smem, size = 0x4, offset = 0x4, fixed_abs, tag = 'smem constant byte address 0x4 - core index']
  #allocation1 [shape = 'u32[144,128]{1,0:T(1,128)}', space=vmem, size = 0x12000, scoped, tag = 'internal scratch']
  %s0 = inlined_call_operand.hbm [shape: f32[2,3], index: 0, kind: input, shape index: {}]
  %s1 = inlined_call_operand.hbm [shape: f32[1,1], index: 1, kind: output, shape index: {}]
  %s2 = sld [smem:[#allocation0]]
  $region18: #{tpu_custom_call.1} parent=0
    _
  %s4 = ssub.s32 1, %s2
  %s5 = scalar_select 0, %s4, %s2
  $region1: #{tpu_custom_call.1} parent=0
    #allocation2 [shape = 'u8[1024]{0}', space=vmem, size = 0x400, scoped, tag = 'input window, operand 0, single buffered']
    #allocation3 [shape = 's32[1]{0}', space=sflag, size = 0x4, scoped, tag = 'scoped memory for tpu_custom_call.1']
    #allocation4 [shape = 's32[1]{0}', space=sflag, size = 0x4, scoped, tag = 'scoped memory for tpu_custom_call.1']
    #allocation5 [shape = 'u8[512]{0}', space=smem, size = 0x200, scoped, tag = 'output window, operand 0, single buffered']
    %6 = vsyncpa [#allocation3], 0
    %7 = vsyncpa [#allocation4], 0
    // Predicated region
    $region2: #{tpu_custom_call.1} parent=1 // pred_check
      _
    $region3: #{tpu_custom_call.1} parent=1 // pred_check_branch
      %9 = sbr.rel (0) target = $region5
    $region4: #{tpu_custom_call.1} parent=1 // pred_region
      %s11 = ssub.s32 32, 32
      %12 = vsyncadd [#allocation3], %s11
      %s14 = sshll.u32 [#allocation2], 4
      %s15 = int_to_ptr.vmem [resolvable:$true] %s14
      %17 = dma.hbm_to_vmem [thread:$0]  %s0, 32, %s15, [#allocation3]
    $region5: #{tpu_custom_call.1} parent=1 // pred_fallthru
      _
    // Predicated region
    $region6: #{tpu_custom_call.1} parent=1 // pred_check
      _
    $region7: #{tpu_custom_call.1} parent=1 // pred_check_branch
      %19 = sbr.rel (0) target = $region9
    $region8: #{tpu_custom_call.1} parent=1 // pred_region
      %20 = dma.done [#allocation3], 32
    $region9: #{tpu_custom_call.1} parent=1 // pred_fallthru
      _
    %v21 = vld [vmem:[#allocation2] sm:$0x1]
    %v22 = vld [vmem:[#allocation2 + $0x1] sm:$0x1]
    %v23 = vsub.f32 0.0, %v21
    %v24 = vmul.f32 %v23, 1.442695
    %v25 = vpow.pop %v24
    %v26 = vmul.f32 %v25, %v22
    %v27 = vadd.f32 %v26, %v21
    %vm28 = vcmask 16384
    %v29 = vsel %vm28, %v27, 0.0
    %30 = vadd.xlane.f32.xlu0 %v29
    %v31 = vpop.xlane.xlu0 %30
    %v32 = vrot.slane %v31, 4
    %v33 = vadd.f32 %v31, %v32
    %v34 = vrot.slane %v33, 2
    %v35 = vadd.f32 %v33, %v34
    %v36 = vrot.slane %v35, 1
    %v37 = vadd.f32 %v35, %v36
    %s38 = vtos %v37
    %s39 = scalar_lea.smem [#allocation5], 0
    %40 = sst [smem:[%s39]] %s38
    // Predicated region
    $region10: #{tpu_custom_call.1} parent=1 // pred_check
      _
    $region11: #{tpu_custom_call.1} parent=1 // pred_check_branch
      %42 = sbr.rel (0) target = $region13
    $region12: #{tpu_custom_call.1} parent=1 // pred_region
      %s44 = ssub.s32 16, 16
      %45 = vsyncadd [#allocation4], %s44
      %48 = dma.smem_to_hbm [#allocation5], 16, %s1, [#allocation4]
    $region13: #{tpu_custom_call.1} parent=1 // pred_fallthru
      _
    // Predicated region
    $region14: #{tpu_custom_call.1} parent=1 // pred_check
      _
    $region15: #{tpu_custom_call.1} parent=1 // pred_check_branch
      %50 = sbr.rel (0) target = $region17
    $region16: #{tpu_custom_call.1} parent=1 // pred_region
      %51 = dma.done [#allocation4], 16
    $region17: #{tpu_custom_call.1} parent=1 // pred_fallthru
      _
    %52 = sfence
    %53 = vsyncpa [#allocation3], 1
    %54 = vsyncpa [#allocation4], 1

</llo_original>
